<compile_context>
chip_gen: v6e
topology: v6e:2x2x1
jax: 0.10.0
libtpu: 0.0.40
codegen_flags: <defaults>
</compile_context>

<pallas_src>
import jax
import jax.numpy as jnp
from jax.experimental import pallas as pl
from jax.experimental.pallas import tpu as pltpu

BN_EPS = 1e-5

# ---- packed-parameter slab: (P_ROWS, 128) f32, all blocks full-lane-width ---
# Row offsets of multi-row blocks are multiples of 8 (sublane-tile aligned).
_W1 = 0       # rows [  0,  64): Linear1 weight (64x64), cols 64..127 zero
_G1 = 64      # row 64         : BN1 gamma  (cols 64..127 zero)
_BE1 = 65     # row 65         : BN1 beta   (cols 64..127 zero)
#             # rows 66..71    : padding
_W2 = 72      # rows [ 72, 200): Linear2 weight as 128x128, real block [0:64,0:32]
_G2 = 200     # row 200        : BN2 gamma  (cols 32..127 zero)
_BE2 = 201    # row 201        : BN2 beta   (cols 32..127 zero)
_W3T = 202    # row 202        : Linear3 weight transposed (cols 32..127 zero)
_B3 = 203     # row 203, col 0 : Linear3 bias (scalar)
P_ROWS = 208  # 204 rounded up to a multiple of 8
P_COLS = 128


def gq_head_kernel(x_ref, p_ref, out_ref):
    TN, B, F = x_ref.shape                      # static (TN sub-batches of B)
    R = TN * B

    # (TN, B, 64) -> (R, 64); free relayout when B % 8 == 0 (sublane tile).
    x = x_ref[...].reshape(R, F)

    # Full-lane-width (128-col), tile-aligned static slices of the slab.
    w1 = p_ref[_W1:_W1 + 64, :]                 # (64, 128)
    g1 = p_ref[_G1:_G1 + 1, :]                  # (1, 128)
    be1 = p_ref[_BE1:_BE1 + 1, :]               # (1, 128)
    w2 = p_ref[_W2:_W2 + 128, :]                # (128, 128)
    g2 = p_ref[_G2:_G2 + 1, :]                  # (1, 128)
    be2 = p_ref[_BE2:_BE2 + 1, :]               # (1, 128)
    w3t = p_ref[_W3T:_W3T + 1, :]               # (1, 128) == w3^T (padded)
    b3 = p_ref[_B3:_B3 + 1, 0:1]                # (1, 1)

    def bn_relu(h_flat, gamma, beta):
        # Training-mode BatchNorm1d computed PER SUB-BATCH (axis=1 of the
        # (TN, B, C) view), biased variance, affine folded into a single FMA.
        # gamma/beta pad lanes are 0  =>  pad lanes stay exactly 0.
        h = h_flat.reshape(TN, B, P_COLS)
        mean = jnp.mean(h, axis=1, keepdims=True)                # (TN, 1, 128)
        var = jnp.mean((h - mean) ** 2, axis=1, keepdims=True)   # (TN, 1, 128)
        scale = gamma * jax.lax.rsqrt(var + BN_EPS)              # (TN, 1, 128)
        shift = beta - mean * scale                              # (TN, 1, 128)
        return jnp.maximum(h * scale + shift, 0.0).reshape(R, P_COLS)

    # b1/b2 omitted: batch-stats BN mean-subtraction cancels them exactly.
    h1 = bn_relu(jnp.dot(x, w1, preferred_element_type=jnp.float32), g1, be1)
    h2 = bn_relu(jnp.dot(h1, w2, preferred_element_type=jnp.float32), g2, be2)

    # Final layer as (1,128) x (R,128) contracted on the lane axis -> (1, R):
    # the (flattened) batch lands on the 128-lane axis => lane-dense store.
    h3 = jax.lax.dot_general(w3t, h2, (((1,), (1,)), ((), ())),
                             preferred_element_type=jnp.float32) + b3
    out_ref[...] = h3                            # (1, R)


def _vmem_limit_bytes(rows):
    # Double-buffered x/out blocks + resident parameter slab + f32
    # intermediates, plus headroom.  Tight clamp: [2 MiB, 16 MiB] — well under
    # every generation's scoped default (v5e 16 MiB, v6e/v7x 32 MiB).
    est = 4 * (2 * rows * 64 + 2 * rows + 2 * P_ROWS * P_COLS
               + 4 * rows * P_COLS)
    return int(min(max(est + (1 << 20), 2 << 20), 16 << 20))


def _pick_tn(N, B):
    """Sub-batches per grid step for gq_forward_many.

    Constraints: TN divides N; either TN == N (single step, full-array output
    block) or TN*B % 128 == 0 (unmasked 128-lane output stores).  Prefer >= 2
    grid steps (v7x megacore) and >= 256 flattened rows (fills the 256-wide
    MXU on v6e/v7x).
    """
    multi = [tn for tn in range(1, N) if N % tn == 0 and (tn * B) % 128 == 0]
    if multi:
        for tn in multi:
            if tn * B >= 256:
                return tn
        return multi[-1]
    return N


def gq_forward(x, packed_params):
    """x: (B, 64) f32, packed_params: (P_ROWS, 128) f32 -> (B,) f32."""
    B, F = x.shape
    vmem_spec = pl.BlockSpec(memory_space=pltpu.MemorySpace.VMEM)
    out = pl.pallas_call(
        gq_head_kernel,
        out_shape=jax.ShapeDtypeStruct((1, B), jnp.float32),
        in_specs=[vmem_spec, vmem_spec],
        out_specs=vmem_spec,
        compiler_params=pltpu.CompilerParams(
            vmem_limit_bytes=_vmem_limit_bytes(B)),
    )(x.reshape(1, B, F), packed_params)
    return out.reshape(-1)  # .view(-1)


def gq_forward_many(x_stacked, packed_params):
    """Amortized path: N independent forward() batches in one launch.

    x_stacked: (N, B, 64) f32 -> (N, B) f32.  Each sub-batch is an independent
    forward() call (BN statistics per sub-batch, exactly as N separate PyTorch
    forward() invocations).  TN sub-batches are processed per grid step; the
    parameter slab is DMA'd once and stays VMEM-resident (constant index_map).
    NOTE: B should be a multiple of 8 so the in-kernel (TN,B,C)<->(TN*B,C)
    reshape is a free relayout.
    """
    N, B, F = x_stacked.shape
    TN = _pick_tn(N, B)
    steps = N // TN
    out = pl.pallas_call(
        gq_head_kernel,
        out_shape=jax.ShapeDtypeStruct((1, N * B), jnp.float32),
        grid=(steps,),
        in_specs=[
            pl.BlockSpec((TN, B, F), lambda n: (n, 0, 0)),
            pl.BlockSpec((P_ROWS, P_COLS), lambda n: (0, 0)),  # weights resident
        ],
        out_specs=pl.BlockSpec((1, TN * B), lambda n: (0, n)),  # lane-dense
        compiler_params=pltpu.CompilerParams(
            dimension_semantics=("parallel",),       # 2 TCs on v7x
            vmem_limit_bytes=_vmem_limit_bytes(TN * B)),
    )(x_stacked, packed_params)
    return out.reshape(N, B)


def init_params(key,
                spatial_encoder_dims=(32, 32),
                hand_encoder_dims=(32, 32),
                gq_head_dims=(64, 32)):
    """Deterministic synthetic gq_head parameters (PyTorch-style uniform init)."""
    in_dim = spatial_encoder_dims[-1] + hand_encoder_dims[-1]  # 64
    dims = [in_dim, gq_head_dims[0], gq_head_dims[1], 1]       # 64->64->32->1

    def linear(key, d_in, d_out):
        kw, kb = jax.random.split(key)
        bound = 1.0 / jnp.sqrt(d_in)
        w = jax.random.uniform(kw, (d_in, d_out), jnp.float32, -bound, bound)
        b = jax.random.uniform(kb, (1, d_out), jnp.float32, -bound, bound)
        return w, b

    k1, k2, k3 = jax.random.split(key, 3)
    w1, b1 = linear(k1, dims[0], dims[1])
    w2, b2 = linear(k2, dims[1], dims[2])
    w3, b3 = linear(k3, dims[2], dims[3])

    return dict(
        w1=w1, b1=b1,
        g1=jnp.ones((1, dims[1]), jnp.float32), be1=jnp.zeros((1, dims[1]), jnp.float32),
        w2=w2, b2=b2,
        g2=jnp.ones((1, dims[2]), jnp.float32), be2=jnp.zeros((1, dims[2]), jnp.float32),
        w3=w3, b3=b3,
    )


def pack_params(p):
    """Pack all gq_head parameters into one (P_ROWS, 128) f32 slab.

    Every block is zero-padded to full 128-lane width; b1/b2 are intentionally
    NOT packed (cancelled by training-mode BN).
    """
    slab = jnp.zeros((P_ROWS, P_COLS), jnp.float32)
    slab = slab.at[_W1:_W1 + 64, 0:64].set(p["w1"])
    slab = slab.at[_G1, 0:64].set(p["g1"].reshape(-1))
    slab = slab.at[_BE1, 0:64].set(p["be1"].reshape(-1))
    slab = slab.at[_W2:_W2 + 64, 0:32].set(p["w2"])
    slab = slab.at[_G2, 0:32].set(p["g2"].reshape(-1))
    slab = slab.at[_BE2, 0:32].set(p["be2"].reshape(-1))
    slab = slab.at[_W3T, 0:32].set(p["w3"].reshape(-1))
    slab = slab.at[_B3, 0].set(p["b3"].reshape(())[()])
    return slab


def gq_forward_ref(x, p):
    """Pure-JAX reference matching the PyTorch forward exactly (incl. b1/b2)."""
    def bn_relu(h, g, b):
        mean = jnp.mean(h, axis=0, keepdims=True)
        var = jnp.mean((h - mean) ** 2, axis=0, keepdims=True)
        return jnp.maximum((h - mean) / jnp.sqrt(var + BN_EPS) * g + b, 0.0)

    h = bn_relu(x @ p["w1"] + p["b1"], p["g1"], p["be1"])
    h = bn_relu(h @ p["w2"] + p["b2"], p["g2"], p["be2"])
    return (h @ p["w3"] + p["b3"]).reshape(-1)


if __name__ == "__main__":
    key = jax.random.PRNGKey(0)
    kx, kp, kb = jax.random.split(key, 3)

    B = 8
    IN_DIM = 64  # spatial_encoder_dims[-1] + hand_encoder_dims[-1] = 32 + 32
    x = jax.random.normal(kx, (B, IN_DIM), jnp.float32)
    params = init_params(kp)
    packed = pack_params(params)

    # Single-batch forward (matches GQEstimator.forward).
    out = jax.block_until_ready(gq_forward(x, packed))
    ref = gq_forward_ref(x, params)
    assert out.shape == (B,)
    assert jnp.allclose(out, ref, atol=1e-4, rtol=1e-4), "Pallas kernel mismatch vs reference"

    # Amortized multi-call path: 32 independent forward() batches, one launch,
    # TN=16 sub-batches per grid step (128 flattened rows, 128-lane stores,
    # 2 grid steps so both v7x TensorCores get work).
    N = 32
    xs = jax.random.normal(kb, (N, B, IN_DIM), jnp.float32)
    outs = jax.block_until_ready(gq_forward_many(xs, packed))
    refs = jnp.stack([gq_forward_ref(xs[i], params) for i in range(N)])
    assert outs.shape == (N, B)
    assert jnp.allclose(outs, refs, atol=1e-4, rtol=1e-4), "Batched Pallas kernel mismatch"

    print("KERNEL_OK")
</pallas_src>

<mosaic_0001>
module attributes {stable_mosaic.version = 11 : i64} {
  func.func @gq_head_kernel(%arg0: memref<1x8x64xf32, #tpu.memory_space<vmem>>, %arg1: memref<208x128xf32, #tpu.memory_space<vmem>>, %arg2: memref<1x8xf32, #tpu.memory_space<vmem>>) attributes {dimension_semantics = [], scalar_prefetch = 0 : i64, scratch_operands = 0 : i64, tpu.core_type = #tpu.core_type<tc>} {
    %c0 = arith.constant 0 : index
    %c0_0 = arith.constant 0 : index
    %c0_1 = arith.constant 0 : index
    %0 = vector.load %arg0[%c0, %c0_0, %c0_1] : memref<1x8x64xf32, #tpu.memory_space<vmem>>, vector<1x8x64xf32>
    %1 = vector.shape_cast %0 : vector<1x8x64xf32> to vector<8x64xf32>
    %c0_2 = arith.constant 0 : index
    %c0_3 = arith.constant 0 : index
    %2 = vector.load %arg1[%c0_2, %c0_3] : memref<208x128xf32, #tpu.memory_space<vmem>>, vector<64x128xf32>
    %c64 = arith.constant 64 : index
    %c0_4 = arith.constant 0 : index
    %3 = vector.load %arg1[%c64, %c0_4] : memref<208x128xf32, #tpu.memory_space<vmem>>, vector<1x128xf32>
    %c65 = arith.constant 65 : index
    %c0_5 = arith.constant 0 : index
    %4 = vector.load %arg1[%c65, %c0_5] : memref<208x128xf32, #tpu.memory_space<vmem>>, vector<1x128xf32>
    %c72 = arith.constant 72 : index
    %c0_6 = arith.constant 0 : index
    %5 = vector.load %arg1[%c72, %c0_6] : memref<208x128xf32, #tpu.memory_space<vmem>>, vector<128x128xf32>
    %c200 = arith.constant 200 : index
    %c0_7 = arith.constant 0 : index
    %6 = vector.load %arg1[%c200, %c0_7] : memref<208x128xf32, #tpu.memory_space<vmem>>, vector<1x128xf32>
    %c201 = arith.constant 201 : index
    %c0_8 = arith.constant 0 : index
    %7 = vector.load %arg1[%c201, %c0_8] : memref<208x128xf32, #tpu.memory_space<vmem>>, vector<1x128xf32>
    %c202 = arith.constant 202 : index
    %c0_9 = arith.constant 0 : index
    %8 = vector.load %arg1[%c202, %c0_9] : memref<208x128xf32, #tpu.memory_space<vmem>>, vector<1x128xf32>
    %c203 = arith.constant 203 : index
    %c0_10 = arith.constant 0 : index
    %9 = vector.load %arg1[%c203, %c0_10] : memref<208x128xf32, #tpu.memory_space<vmem>>, vector<1x1xf32>
    %cst = arith.constant dense<0.000000e+00> : vector<8x128xf32>
    %10 = tpu.matmul %1, %2, %cst {dimension_numbers = #tpu.dot_dimension_numbers<[1], [0], [0], [1], [0, 0, 1, 1], [], []>} : vector<8x64xf32>, vector<64x128xf32>, vector<8x128xf32> -> vector<8x128xf32>
    %11 = vector.shape_cast %10 : vector<8x128xf32> to vector<1x8x128xf32>
    %cst_11 = arith.constant dense<0.000000e+00> : vector<1x128xf32>
    %12 = vector.multi_reduction <add>, %11, %cst_11 [1] : vector<1x8x128xf32> to vector<1x128xf32>
    %13 = vector.shape_cast %12 : vector<1x128xf32> to vector<1x1x128xf32>
    %cst_12 = arith.constant 8.000000e+00 : f32
    %14 = vector.broadcast %cst_12 : f32 to vector<1x1x128xf32>
    %15 = arith.divf %13, %14 : vector<1x1x128xf32>
    %16 = vector.broadcast %15 : vector<1x1x128xf32> to vector<1x8x128xf32>
    %17 = arith.subf %11, %16 : vector<1x8x128xf32>
    %18 = arith.mulf %17, %17 : vector<1x8x128xf32>
    %cst_13 = arith.constant dense<0.000000e+00> : vector<1x128xf32>
    %19 = vector.multi_reduction <add>, %18, %cst_13 [1] : vector<1x8x128xf32> to vector<1x128xf32>
    %20 = vector.shape_cast %19 : vector<1x128xf32> to vector<1x1x128xf32>
    %cst_14 = arith.constant 8.000000e+00 : f32
    %21 = vector.broadcast %cst_14 : f32 to vector<1x1x128xf32>
    %22 = arith.divf %20, %21 : vector<1x1x128xf32>
    %cst_15 = arith.constant 9.99999974E-6 : f32
    %23 = vector.broadcast %cst_15 : f32 to vector<1x1x128xf32>
    %24 = arith.addf %22, %23 : vector<1x1x128xf32>
    %25 = math.rsqrt %24 : vector<1x1x128xf32>
    %26 = vector.shape_cast %3 : vector<1x128xf32> to vector<1x1x128xf32>
    %27 = arith.mulf %26, %25 : vector<1x1x128xf32>
    %28 = arith.mulf %15, %27 : vector<1x1x128xf32>
    %29 = vector.shape_cast %4 : vector<1x128xf32> to vector<1x1x128xf32>
    %30 = arith.subf %29, %28 : vector<1x1x128xf32>
    %31 = vector.broadcast %27 : vector<1x1x128xf32> to vector<1x8x128xf32>
    %32 = arith.mulf %11, %31 : vector<1x8x128xf32>
    %33 = vector.broadcast %30 : vector<1x1x128xf32> to vector<1x8x128xf32>
    %34 = arith.addf %32, %33 : vector<1x8x128xf32>
    %cst_16 = arith.constant 0.000000e+00 : f32
    %35 = vector.broadcast %cst_16 : f32 to vector<1x8x128xf32>
    %36 = arith.maximumf %34, %35 : vector<1x8x128xf32>
    %37 = vector.shape_cast %36 : vector<1x8x128xf32> to vector<8x128xf32>
    %cst_17 = arith.constant dense<0.000000e+00> : vector<8x128xf32>
    %38 = tpu.matmul %37, %5, %cst_17 {dimension_numbers = #tpu.dot_dimension_numbers<[1], [0], [0], [1], [0, 0, 1, 1], [], []>} : vector<8x128xf32>, vector<128x128xf32>, vector<8x128xf32> -> vector<8x128xf32>
    %39 = vector.shape_cast %38 : vector<8x128xf32> to vector<1x8x128xf32>
    %cst_18 = arith.constant dense<0.000000e+00> : vector<1x128xf32>
    %40 = vector.multi_reduction <add>, %39, %cst_18 [1] : vector<1x8x128xf32> to vector<1x128xf32>
    %41 = vector.shape_cast %40 : vector<1x128xf32> to vector<1x1x128xf32>
    %cst_19 = arith.constant 8.000000e+00 : f32
    %42 = vector.broadcast %cst_19 : f32 to vector<1x1x128xf32>
    %43 = arith.divf %41, %42 : vector<1x1x128xf32>
    %44 = vector.broadcast %43 : vector<1x1x128xf32> to vector<1x8x128xf32>
    %45 = arith.subf %39, %44 : vector<1x8x128xf32>
    %46 = arith.mulf %45, %45 : vector<1x8x128xf32>
    %cst_20 = arith.constant dense<0.000000e+00> : vector<1x128xf32>
    %47 = vector.multi_reduction <add>, %46, %cst_20 [1] : vector<1x8x128xf32> to vector<1x128xf32>
    %48 = vector.shape_cast %47 : vector<1x128xf32> to vector<1x1x128xf32>
    %cst_21 = arith.constant 8.000000e+00 : f32
    %49 = vector.broadcast %cst_21 : f32 to vector<1x1x128xf32>
    %50 = arith.divf %48, %49 : vector<1x1x128xf32>
    %cst_22 = arith.constant 9.99999974E-6 : f32
    %51 = vector.broadcast %cst_22 : f32 to vector<1x1x128xf32>
    %52 = arith.addf %50, %51 : vector<1x1x128xf32>
    %53 = math.rsqrt %52 : vector<1x1x128xf32>
    %54 = vector.shape_cast %6 : vector<1x128xf32> to vector<1x1x128xf32>
    %55 = arith.mulf %54, %53 : vector<1x1x128xf32>
    %56 = arith.mulf %43, %55 : vector<1x1x128xf32>
    %57 = vector.shape_cast %7 : vector<1x128xf32> to vector<1x1x128xf32>
    %58 = arith.subf %57, %56 : vector<1x1x128xf32>
    %59 = vector.broadcast %55 : vector<1x1x128xf32> to vector<1x8x128xf32>
    %60 = arith.mulf %39, %59 : vector<1x8x128xf32>
    %61 = vector.broadcast %58 : vector<1x1x128xf32> to vector<1x8x128xf32>
    %62 = arith.addf %60, %61 : vector<1x8x128xf32>
    %cst_23 = arith.constant 0.000000e+00 : f32
    %63 = vector.broadcast %cst_23 : f32 to vector<1x8x128xf32>
    %64 = arith.maximumf %62, %63 : vector<1x8x128xf32>
    %65 = vector.shape_cast %64 : vector<1x8x128xf32> to vector<8x128xf32>
    %cst_24 = arith.constant dense<0.000000e+00> : vector<1x8xf32>
    %66 = tpu.matmul %8, %65, %cst_24 {dimension_numbers = #tpu.dot_dimension_numbers<[1], [1], [0], [0], [0, 0, 1, 0], [], []>} : vector<1x128xf32>, vector<8x128xf32>, vector<1x8xf32> -> vector<1x8xf32>
    %67 = vector.broadcast %9 : vector<1x1xf32> to vector<1x8xf32>
    %68 = arith.addf %66, %67 : vector<1x8xf32>
    %c0_25 = arith.constant 0 : index
    %c0_26 = arith.constant 0 : index
    %69 = vector.load %arg2[%c0_25, %c0_26] : memref<1x8xf32, #tpu.memory_space<vmem>>, vector<1x8xf32>
    tpu.vector_store %arg2[%c0_25, %c0_26], %68 {strides = array<i32>} : memref<1x8xf32, #tpu.memory_space<vmem>>, vector<1x8xf32>,
    return
  }
}

</mosaic_0001>

<llo_original>
// kernel: tpu_custom_call.1
$region0: #{tpu_custom_call.1}
  #allocation0 [shape = 'u32[]', space=smem, size = 0x4, offset = 0x4, fixed_abs, tag = 'smem constant byte address 0x4 - core index']
  #allocation1 [shape = 'u32[144,128]{1,0:T(1,128)}', space=vmem, size = 0x12000, scoped, tag = 'internal scratch']
  %s0 = inlined_call_operand.hbm [shape: f32[1,8,64], index: 0, kind: input, shape index: {}]
  %s1 = inlined_call_operand.hbm [shape: f32[208,128], index: 1, kind: input, shape index: {}]
  %s2 = inlined_call_operand.hbm [shape: f32[1,8], index: 2, kind: output, shape index: {}]
  %s3 = sld [smem:[#allocation0]]
  $region26: #{tpu_custom_call.1} parent=0
    _
  %s5 = ssub.s32 1, %s3
  %s6 = scalar_select 0, %s5, %s3
  $region1: #{tpu_custom_call.1} parent=0
    #allocation2 [shape = 'u8[4096]{0}', space=vmem, size = 0x1000, scoped, tag = 'input window, operand 0, single buffered']
    #allocation3 [shape = 's32[1]{0}', space=sflag, size = 0x4, scoped, tag = 'scoped memory for tpu_custom_call.1']
    #allocation4 [shape = 's32[1]{0}', space=sflag, size = 0x4, scoped, tag = 'scoped memory for tpu_custom_call.1']
    #allocation5 [shape = 'u8[106496]{0}', space=vmem, size = 0x1a000, scoped, tag = 'input window, operand 1, single buffered']
    #allocation6 [shape = 's32[1]{0}', space=sflag, size = 0x4, scoped, tag = 'scoped memory for tpu_custom_call.1']
    #allocation7 [shape = 'u8[512]{0}', space=vmem, size = 0x400, scoped, tag = 'output window, operand 0, single buffered']
    %7 = vsyncpa [#allocation3], 0
    %8 = vsyncpa [#allocation6], 0
    %9 = vsyncpa [#allocation4], 0
    // Predicated region
    $region2: #{tpu_custom_call.1} parent=1 // pred_check
      _
    $region3: #{tpu_custom_call.1} parent=1 // pred_check_branch
      %11 = sbr.rel (0) target = $region5
    $region4: #{tpu_custom_call.1} parent=1 // pred_region
      %s13 = ssub.s32 128, 128
      %14 = vsyncadd [#allocation3], %s13
      %s16 = sshll.u32 [#allocation2], 4
      %s17 = int_to_ptr.vmem [resolvable:$true] %s16
      %19 = dma.hbm_to_vmem [thread:$0]  %s0, 128, %s17, [#allocation3]
    $region5: #{tpu_custom_call.1} parent=1 // pred_fallthru
      _
    // Predicated region
    $region6: #{tpu_custom_call.1} parent=1 // pred_check
      _
    $region7: #{tpu_custom_call.1} parent=1 // pred_check_branch
      %21 = sbr.rel (0) target = $region9
    $region8: #{tpu_custom_call.1} parent=1 // pred_region
      %s23 = ssub.s32 3328, 3328
      %24 = vsyncadd [#allocation6], %s23
      %s25 = sshll.u32 [#allocation5], 4
      %s26 = int_to_ptr.vmem [resolvable:$true] %s25
      %31 = dma.hbm_to_vmem [thread:$0]  %s1, 3328, %s26, [#allocation6], 128, 128, 8
    $region9: #{tpu_custom_call.1} parent=1 // pred_fallthru
      _
    // Predicated region
    $region10: #{tpu_custom_call.1} parent=1 // pred_check
      _
    $region11: #{tpu_custom_call.1} parent=1 // pred_check_branch
      %33 = sbr.rel (0) target = $region13
    $region12: #{tpu_custom_call.1} parent=1 // pred_region
      %34 = dma.done [#allocation3], 128
    $region13: #{tpu_custom_call.1} parent=1 // pred_fallthru
      _
    // Predicated region
    $region14: #{tpu_custom_call.1} parent=1 // pred_check
      _
    $region15: #{tpu_custom_call.1} parent=1 // pred_check_branch
      %36 = sbr.rel (0) target = $region17
    $region16: #{tpu_custom_call.1} parent=1 // pred_region
      %37 = dma.done [#allocation6], 3328
    $region17: #{tpu_custom_call.1} parent=1 // pred_fallthru
      _
    %v38 = vld [vmem:[#allocation2] sm:$0xff]
    %v39 = vld [vmem:[#allocation5] sm:$0xff]
    %v40 = vld [vmem:[#allocation5 + $0x8] sm:$0xff]
    %v41 = vld [vmem:[#allocation5 + $0x10] sm:$0xff]
    %v42 = vld [vmem:[#allocation5 + $0x18] sm:$0xff]
    %v43 = vld [vmem:[#allocation5 + $0x20] sm:$0xff]
    %v44 = vld [vmem:[#allocation5 + $0x28] sm:$0xff]
    %v45 = vld [vmem:[#allocation5 + $0x30] sm:$0xff]
    %v46 = vld [vmem:[#allocation5 + $0x38] sm:$0xff]
    %v47 = vld [vmem:[#allocation5 + $0x40] sm:$0x1]
    %v48 = vld [vmem:[#allocation5 + $0x41] sm:$0x1]
    %v49 = vld [vmem:[#allocation5 + $0x48] sm:$0xff]
    %v50 = vld [vmem:[#allocation5 + $0x50] sm:$0xff]
    %v51 = vld [vmem:[#allocation5 + $0x58] sm:$0xff]
    %v52 = vld [vmem:[#allocation5 + $0x60] sm:$0xff]
    %v53 = vld [vmem:[#allocation5 + $0x68] sm:$0xff]
    %v54 = vld [vmem:[#allocation5 + $0x70] sm:$0xff]
    %v55 = vld [vmem:[#allocation5 + $0x78] sm:$0xff]
    %v56 = vld [vmem:[#allocation5 + $0x80] sm:$0xff]
    %v57 = vld [vmem:[#allocation5 + $0x88] sm:$0xff]
    %v58 = vld [vmem:[#allocation5 + $0x90] sm:$0xff]
    %v59 = vld [vmem:[#allocation5 + $0x98] sm:$0xff]
    %v60 = vld [vmem:[#allocation5 + $0xa0] sm:$0xff]
    %v61 = vld [vmem:[#allocation5 + $0xa8] sm:$0xff]
    %v62 = vld [vmem:[#allocation5 + $0xb0] sm:$0xff]
    %v63 = vld [vmem:[#allocation5 + $0xb8] sm:$0xff]
    %v64 = vld [vmem:[#allocation5 + $0xc0] sm:$0xff]
    %v65 = vld [vmem:[#allocation5 + $0xc8] sm:$0x1]
    %v66 = vld [vmem:[#allocation5 + $0xc9] sm:$0x1]
    %v67 = vld [vmem:[#allocation5 + $0xca] sm:$0x1]
    %v68 = vld [vmem:[#allocation5 + $0xcb] sm:$0x1]
    %vm69 = vcmask 523264
    %v71 = vsel %vm69, %v38, 0
    %73 = vmatprep.subr.mxu0 0.0
    %74 = vmatpush1.msra.mxu0 0.0
    %75 = vmatprep.subr.mxu0 0.0
    %76 = vmatpush1.msra.mxu0 0.0
    %77 = vmatprep.subr.mxu0 0.0
    %78 = vmatpush1.msra.mxu0 0.0
    %79 = vmatprep.subr.mxu0 0.0
    %80 = vmatpush1.msra.mxu0 0.0
    %81 = vmatprep.subr.mxu0 0.0
    %82 = vmatpush1.msra.mxu0 0.0
    %83 = vmatprep.subr.mxu0 0.0
    %84 = vmatpush1.msra.mxu0 0.0
    %85 = vmatprep.subr.mxu0 0.0
    %86 = vmatpush1.msra.mxu0 0.0
    %87 = vmatprep.subr.mxu0 0.0
    %88 = vmatpush1.msra.mxu0 0.0
    %89 = vmatprep.subr.mxu0 0.0
    %90 = vmatpush1.msra.mxu0 %v46
    %91 = vmatprep.subr.mxu0 0.0
    %92 = vmatpush1.msra.mxu0 %v45
    %93 = vmatprep.subr.mxu0 0.0
    %94 = vmatpush1.msra.mxu0 %v44
    %95 = vmatprep.subr.mxu0 0.0
    %96 = vmatpush1.msra.mxu0 %v43
    %97 = vmatprep.subr.mxu0 0.0
    %98 = vmatpush1.msra.mxu0 %v42
    %99 = vmatprep.subr.mxu0 0.0
    %100 = vmatpush1.msra.mxu0 %v41
    %101 = vmatprep.subr.mxu0 0.0
    %102 = vmatpush1.msra.mxu0 %v40
    %103 = vmatprep.subr.mxu0 0.0
    %104 = vmatpush1.msra.mxu0 %v39
    %105 = vmatprep.subr.mxu0 0.0
    %106 = vmatpush2.msra.mxu0 0.0
    %107 = vmatprep.subr.mxu0 0.0
    %108 = vmatpush2.msra.mxu0 0.0
    %109 = vmatprep.subr.mxu0 0.0
    %110 = vmatpush2.msra.mxu0 0.0
    %111 = vmatprep.subr.mxu0 0.0
    %112 = vmatpush2.msra.mxu0 0.0
    %113 = vmatprep.subr.mxu0 0.0
    %114 = vmatpush2.msra.mxu0 0.0
    %115 = vmatprep.subr.mxu0 0.0
    %116 = vmatpush2.msra.mxu0 0.0
    %117 = vmatprep.subr.mxu0 0.0
    %118 = vmatpush2.msra.mxu0 0.0
    %119 = vmatprep.subr.mxu0 0.0
    %120 = vmatpush2.msra.mxu0 0.0
    %121 = vmatprep.subr.mxu0 0.0
    %122 = vmatpush2.msra.mxu0 0.0
    %123 = vmatprep.subr.mxu0 0.0
    %124 = vmatpush2.msra.mxu0 0.0
    %125 = vmatprep.subr.mxu0 0.0
    %126 = vmatpush2.msra.mxu0 0.0
    %127 = vmatprep.subr.mxu0 0.0
    %128 = vmatpush2.msra.mxu0 0.0
    %129 = vmatprep.subr.mxu0 0.0
    %130 = vmatpush2.msra.mxu0 0.0
    %131 = vmatprep.subr.mxu0 0.0
    %132 = vmatpush2.msra.mxu0 0.0
    %133 = vmatprep.subr.mxu0 0.0
    %134 = vmatpush2.msra.mxu0 0.0
    %135 = vmatprep.subr.mxu0 0.0
    %136 = vmatpush2.msra.mxu0 0.0
    %137 = vmatprep.mubr.f32.mxu0 0.0
    %138 = vmatmul.mubr.f32.gmra.mxu0 %v71
    %v139 = vpop.f32.mrf.mxu0
    %v140 = vadd.f32 0.0, %v139
    %v141 = vpop.f32.mrf.mxu0
    %142 = vdwg.mxu0
    %v143 = vrot.slane %v140, 4
    %v144 = vadd.f32 %v140, %v143
    %v145 = vrot.slane %v144, 2
    %v146 = vadd.f32 %v144, %v145
    %v147 = vrot.slane %v146, 1
    %v148 = vadd.f32 %v146, %v147
    %v149 = vrcp.pop 8.0
    %v150 = vmul.f32 %v148, %v149
    %v151 = vsub.f32 %v140, %v150
    %v152 = vmul.f32 %v151, %v151
    %v153 = vrot.slane %v152, 4
    %v154 = vadd.f32 %v152, %v153
    %v155 = vrot.slane %v154, 2
    %v156 = vadd.f32 %v154, %v155
    %v157 = vrot.slane %v156, 1
    %v158 = vadd.f32 %v156, %v157
    %v159 = vmul.f32 %v158, %v149
    %v160 = vadd.f32 %v159, 1e-05
    %v161 = vrsqrt.pop %v160
    %v162 = vmul.f32 %v47, %v161
    %v163 = vmul.f32 %v150, %v162
    %v164 = vsub.f32 %v48, %v163
    %v165 = vlaneseq
    %v166 = vshrl.u32 %v165, 7
    %v167 = vsub.s32 0, %v166
    %v168 = vrot.slane %v162, %v167
    %v169 = vmul.f32 %v140, %v168
    %v170 = vlaneseq
    %v171 = vshrl.u32 %v170, 7
    %v172 = vsub.s32 0, %v171
    %v173 = vrot.slane %v164, %v172
    %v174 = vadd.f32 %v169, %v173
    %v175 = vmax.f32 %v174, 0.0
    %176 = vmatprep.subr.mxu0 0.0
    %177 = vmatpush1.msra.mxu0 %v64
    %178 = vmatprep.subr.mxu0 0.0
    %179 = vmatpush1.msra.mxu0 %v63
    %180 = vmatprep.subr.mxu0 0.0
    %181 = vmatpush1.msra.mxu0 %v62
    %182 = vmatprep.subr.mxu0 0.0
    %183 = vmatpush1.msra.mxu0 %v61
    %184 = vmatprep.subr.mxu0 0.0
    %185 = vmatpush1.msra.mxu0 %v60
    %186 = vmatprep.subr.mxu0 0.0
    %187 = vmatpush1.msra.mxu0 %v59
    %188 = vmatprep.subr.mxu0 0.0
    %189 = vmatpush1.msra.mxu0 %v58
    %190 = vmatprep.subr.mxu0 0.0
    %191 = vmatpush1.msra.mxu0 %v57
    %192 = vmatprep.subr.mxu0 0.0
    %193 = vmatpush1.msra.mxu0 %v56
    %194 = vmatprep.subr.mxu0 0.0
    %195 = vmatpush1.msra.mxu0 %v55
    %196 = vmatprep.subr.mxu0 0.0
    %197 = vmatpush1.msra.mxu0 %v54
    %198 = vmatprep.subr.mxu0 0.0
    %199 = vmatpush1.msra.mxu0 %v53
    %200 = vmatprep.subr.mxu0 0.0
    %201 = vmatpush1.msra.mxu0 %v52
    %202 = vmatprep.subr.mxu0 0.0
    %203 = vmatpush1.msra.mxu0 %v51
    %204 = vmatprep.subr.mxu0 0.0
    %205 = vmatpush1.msra.mxu0 %v50
    %206 = vmatprep.subr.mxu0 0.0
    %207 = vmatpush1.msra.mxu0 %v49
    %208 = vmatprep.subr.mxu0 0.0
    %209 = vmatpush2.msra.mxu0 0.0
    %210 = vmatprep.subr.mxu0 0.0
    %211 = vmatpush2.msra.mxu0 0.0
    %212 = vmatprep.subr.mxu0 0.0
    %213 = vmatpush2.msra.mxu0 0.0
    %214 = vmatprep.subr.mxu0 0.0
    %215 = vmatpush2.msra.mxu0 0.0
    %216 = vmatprep.subr.mxu0 0.0
    %217 = vmatpush2.msra.mxu0 0.0
    %218 = vmatprep.subr.mxu0 0.0
    %219 = vmatpush2.msra.mxu0 0.0
    %220 = vmatprep.subr.mxu0 0.0
    %221 = vmatpush2.msra.mxu0 0.0
    %222 = vmatprep.subr.mxu0 0.0
    %223 = vmatpush2.msra.mxu0 0.0
    %224 = vmatprep.subr.mxu0 0.0
    %225 = vmatpush2.msra.mxu0 0.0
    %226 = vmatprep.subr.mxu0 0.0
    %227 = vmatpush2.msra.mxu0 0.0
    %228 = vmatprep.subr.mxu0 0.0
    %229 = vmatpush2.msra.mxu0 0.0
    %230 = vmatprep.subr.mxu0 0.0
    %231 = vmatpush2.msra.mxu0 0.0
    %232 = vmatprep.subr.mxu0 0.0
    %233 = vmatpush2.msra.mxu0 0.0
    %234 = vmatprep.subr.mxu0 0.0
    %235 = vmatpush2.msra.mxu0 0.0
    %236 = vmatprep.subr.mxu0 0.0
    %237 = vmatpush2.msra.mxu0 0.0
    %238 = vmatprep.subr.mxu0 0.0
    %239 = vmatpush2.msra.mxu0 0.0
    %240 = vmatprep.mubr.f32.mxu0 0.0
    %241 = vmatmul.mubr.f32.gmra.mxu0 %v175
    %v242 = vpop.f32.mrf.mxu0
    %v243 = vadd.f32 0.0, %v242
    %v244 = vpop.f32.mrf.mxu0
    %245 = vdwg.mxu0
    %v246 = vrot.slane %v243, 4
    %v247 = vadd.f32 %v243, %v246
    %v248 = vrot.slane %v247, 2
    %v249 = vadd.f32 %v247, %v248
    %v250 = vrot.slane %v249, 1
    %v251 = vadd.f32 %v249, %v250
    %v252 = vmul.f32 %v251, %v149
    %v253 = vsub.f32 %v243, %v252
    %v254 = vmul.f32 %v253, %v253
    %v255 = vrot.slane %v254, 4
    %v256 = vadd.f32 %v254, %v255
    %v257 = vrot.slane %v256, 2
    %v258 = vadd.f32 %v256, %v257
    %v259 = vrot.slane %v258, 1
    %v260 = vadd.f32 %v258, %v259
    %v261 = vmul.f32 %v260, %v149
    %v262 = vadd.f32 %v261, 1e-05
    %v263 = vrsqrt.pop %v262
    %v264 = vmul.f32 %v65, %v263
    %v265 = vmul.f32 %v252, %v264
    %v266 = vsub.f32 %v66, %v265
    %v267 = vlaneseq
    %v268 = vshrl.u32 %v267, 7
    %v269 = vsub.s32 0, %v268
    %v270 = vrot.slane %v264, %v269
    %v271 = vmul.f32 %v243, %v270
    %v272 = vlaneseq
    %v273 = vshrl.u32 %v272, 7
    %v274 = vsub.s32 0, %v273
    %v275 = vrot.slane %v266, %v274
    %v276 = vadd.f32 %v271, %v275
    %v277 = vmax.f32 %v276, 0.0
    %279 = vset.pattern.permute.xlu0 0
    %280 = vperm.xlu0 %279, %v68
    %v281 = vpop.permute.xlu0 %280
    %283 = vmatprep.subr.mxu0 0.0
    %284 = vmatpush1.xpose.msra.mxu0 0.0
    %285 = vmatprep.subr.mxu0 0.0
    %286 = vmatpush1.xpose.msra.mxu0 0.0
    %287 = vmatprep.subr.mxu0 0.0
    %288 = vmatpush1.xpose.msra.mxu0 0.0
    %289 = vmatprep.subr.mxu0 0.0
    %290 = vmatpush1.xpose.msra.mxu0 0.0
    %291 = vmatprep.subr.mxu0 0.0
    %292 = vmatpush1.xpose.msra.mxu0 0.0
    %293 = vmatprep.subr.mxu0 0.0
    %294 = vmatpush1.xpose.msra.mxu0 0.0
    %295 = vmatprep.subr.mxu0 0.0
    %296 = vmatpush1.xpose.msra.mxu0 0.0
    %297 = vmatprep.subr.mxu0 0.0
    %298 = vmatpush1.xpose.msra.mxu0 0.0
    %299 = vmatprep.subr.mxu0 0.0
    %300 = vmatpush1.xpose.msra.mxu0 0.0
    %301 = vmatprep.subr.mxu0 0.0
    %302 = vmatpush1.xpose.msra.mxu0 0.0
    %303 = vmatprep.subr.mxu0 0.0
    %304 = vmatpush1.xpose.msra.mxu0 0.0
    %305 = vmatprep.subr.mxu0 0.0
    %306 = vmatpush1.xpose.msra.mxu0 0.0
    %307 = vmatprep.subr.mxu0 0.0
    %308 = vmatpush1.xpose.msra.mxu0 0.0
    %309 = vmatprep.subr.mxu0 0.0
    %310 = vmatpush1.xpose.msra.mxu0 0.0
    %311 = vmatprep.subr.mxu0 0.0
    %312 = vmatpush1.xpose.msra.mxu0 0.0
    %313 = vmatprep.subr.mxu0 0.0
    %314 = vmatpush1.xpose.msra.mxu0 %v277
    %315 = vmatprep.subr.mxu0 0.0
    %316 = vmatpush2.xpose.msra.mxu0 0.0
    %317 = vmatprep.subr.mxu0 0.0
    %318 = vmatpush2.xpose.msra.mxu0 0.0
    %319 = vmatprep.subr.mxu0 0.0
    %320 = vmatpush2.xpose.msra.mxu0 0.0
    %321 = vmatprep.subr.mxu0 0.0
    %322 = vmatpush2.xpose.msra.mxu0 0.0
    %323 = vmatprep.subr.mxu0 0.0
    %324 = vmatpush2.xpose.msra.mxu0 0.0
    %325 = vmatprep.subr.mxu0 0.0
    %326 = vmatpush2.xpose.msra.mxu0 0.0
    %327 = vmatprep.subr.mxu0 0.0
    %328 = vmatpush2.xpose.msra.mxu0 0.0
    %329 = vmatprep.subr.mxu0 0.0
    %330 = vmatpush2.xpose.msra.mxu0 0.0
    %331 = vmatprep.subr.mxu0 0.0
    %332 = vmatpush2.xpose.msra.mxu0 0.0
    %333 = vmatprep.subr.mxu0 0.0
    %334 = vmatpush2.xpose.msra.mxu0 0.0
    %335 = vmatprep.subr.mxu0 0.0
    %336 = vmatpush2.xpose.msra.mxu0 0.0
    %337 = vmatprep.subr.mxu0 0.0
    %338 = vmatpush2.xpose.msra.mxu0 0.0
    %339 = vmatprep.subr.mxu0 0.0
    %340 = vmatpush2.xpose.msra.mxu0 0.0
    %341 = vmatprep.subr.mxu0 0.0
    %342 = vmatpush2.xpose.msra.mxu0 0.0
    %343 = vmatprep.subr.mxu0 0.0
    %344 = vmatpush2.xpose.msra.mxu0 0.0
    %345 = vmatprep.subr.mxu0 0.0
    %346 = vmatpush2.xpose.msra.mxu0 0.0
    %347 = vmatprep.mubr.f32.mxu0 0.0
    %348 = vmatmul.mubr.f32.gmra.mxu0 %v67
    %v349 = vpop.f32.mrf.mxu0
    %v350 = vadd.f32 %v281, %v349
    %v351 = vpop.f32.mrf.mxu0
    %352 = vdwg.mxu0
    %vm353 = vcmask 57344
    %354 = vst.msk [vmem:[#allocation7] sm:$0x1] %vm353, %v350
    // Predicated region
    $region18: #{tpu_custom_call.1} parent=1 // pred_check
      _
    $region19: #{tpu_custom_call.1} parent=1 // pred_check_branch
      %356 = sbr.rel (0) target = $region21
    $region20: #{tpu_custom_call.1} parent=1 // pred_region
      %s358 = ssub.s32 16, 16
      %359 = vsyncadd [#allocation4], %s358
      %s361 = sshll.u32 [#allocation7], 4
      %s362 = int_to_ptr.vmem [resolvable:$true] %s361
      %364 = dma.vmem_to_hbm [thread:$0]  %s362, 16, %s2, [#allocation4]
    $region21: #{tpu_custom_call.1} parent=1 // pred_fallthru
      _
    // Predicated region
    $region22: #{tpu_custom_call.1} parent=1 // pred_check
      _
    $region23: #{tpu_custom_call.1} parent=1 // pred_check_branch
      %366 = sbr.rel (0) target = $region25
    $region24: #{tpu_custom_call.1} parent=1 // pred_region
      %367 = dma.done [#allocation4], 16
    $region25: #{tpu_custom_call.1} parent=1 // pred_fallthru
      _
    %368 = vsyncpa [#allocation3], 1
    %369 = vsyncpa [#allocation6], 1
    %370 = vsyncpa [#allocation4], 1

</llo_original>
